<compile_context>
chip_gen: v6e
topology: v6e:2x2x1
jax: 0.10.0
libtpu: 0.0.40
codegen_flags: <defaults>
</compile_context>

<pallas_src>
import jax
import jax.numpy as jnp
from jax.experimental import pallas as pl
from jax.experimental.pallas import tpu as pltpu
import numpy as np


def lstm_encoder_kernel(x_ref, wih_ref, whh_ref, b_ref, wfc_ref, out_ref):
    # x_ref   : (T*Bp, C)  time-major rows (row index = t*Bp + b), f32, Bp % 8 == 0
    # wih_ref : (C, 4H)    W_ih^T, i/f/o columns pre-scaled by 0.5
    # whh_ref : (H, 4H)    W_hh^T, i/f/o columns pre-scaled by 0.5
    # b_ref   : (1, 4H)    (b_ih + b_hh), i/f/o lanes pre-scaled by 0.5
    # wfc_ref : (H, P)     W_fc^T
    # out_ref : (Bp, P)
    H = whh_ref.shape[0]
    Bp = out_ref.shape[0]
    T = x_ref.shape[0] // Bp
    H4 = 4 * H

    # Hoisted input projection for ALL timesteps: one (T*Bp, C) x (C, 4H) MXU
    # call + one bias add. Kept as a value (no explicit VMEM scratch).
    gx = jnp.dot(x_ref[...], wih_ref[...],
                 preferred_element_type=jnp.float32) + b_ref[...]

    whh = whh_ref[...]  # hoisted out of the time loop

    # Post-tanh affine turning the pre-scaled i/f/o lanes into sigmoids and
    # leaving the g (cell-candidate) lanes as plain tanh. Built once, outside
    # the recurrence.
    lane = jax.lax.broadcasted_iota(jnp.int32, (Bp, H4), 1)
    is_g = (lane >= 2 * H) & (lane < 3 * H)
    act_scale = jnp.where(is_g, 1.0, 0.5).astype(jnp.float32)
    act_offset = jnp.where(is_g, 0.0, 0.5).astype(jnp.float32)

    def lstm_cell(gates, c):
        act = jnp.tanh(gates) * act_scale + act_offset
        i_g = act[:, 0 * H:1 * H]
        f_g = act[:, 1 * H:2 * H]
        g_g = act[:, 2 * H:3 * H]
        o_g = act[:, 3 * H:4 * H]
        c_new = f_g * c + i_g * g_g
        h_new = o_g * jnp.tanh(c_new)
        return h_new, c_new

    # t = 0: h0 == 0, so the recurrent matmul contributes nothing -> skip it.
    c0 = jnp.zeros((Bp, H), jnp.float32)
    h, c = lstm_cell(gx[0:Bp, :], c0)

    # Static unroll over the (small, fixed) remaining timesteps: every gx slice
    # has a static, sublane-aligned offset -> full-tile accesses, and the LLO
    # scheduler sees the whole serial chain.
    # TODO(synk): for EEG-realistic T (hundreds+), switch to a chunked
    # lax.fori_loop (unroll=4..8) / time-chunk grid with x left in HBM
    # (BlockSpec(memory_space=pl.ANY) + emit_pipeline) and set vmem_limit_bytes.
    for t in range(1, T):
        gates = gx[t * Bp:(t + 1) * Bp, :] + jnp.dot(
            h, whh, preferred_element_type=jnp.float32)
        h, c = lstm_cell(gates, c)

    # Final bias-free projection fused into the same kernel.
    out_ref[...] = jnp.dot(
        h, wfc_ref[...], preferred_element_type=jnp.float32
    ).astype(out_ref.dtype)


def eeg_encoder_forward(x, w_ih, w_hh, b_ih, b_hh, w_fc):
    """x: (B, T, C) float32.  Weights in PyTorch layout:
       w_ih (4H, C), w_hh (4H, H), b_* (4H,), w_fc (P, H)."""
    B, T, C = x.shape
    H4 = w_ih.shape[0]
    H = H4 // 4
    P = w_fc.shape[0]

    # Pad batch to the 8-sublane tile: padded rows are zeros and LSTM rows are
    # independent across batch, so real rows are unaffected.
    Bp = max(8, ((B + 7) // 8) * 8)

    # Wrapper-side layout plumbing (free): time-major 2-D input so the kernel
    # does a single (T*Bp, C) x (C, 4H) matmul for the whole input projection.
    x_tb = jnp.swapaxes(x, 0, 1).astype(jnp.float32)          # (T, B, C)
    if Bp != B:
        x_tb = jnp.pad(x_tb, ((0, 0), (0, Bp - B), (0, 0)))   # (T, Bp, C)
    x_tb = x_tb.reshape(T * Bp, C)

    # One-time weight transform: fold the 0.5 of sigmoid(z) = 0.5*tanh(z/2)+0.5
    # into the i/f/o gate columns (PyTorch gate order i, f, g, o).
    col = jnp.arange(H4)
    is_g_col = (col >= 2 * H) & (col < 3 * H)
    col_scale = jnp.where(is_g_col, 1.0, 0.5).astype(jnp.float32)

    wih_t = w_ih.T.astype(jnp.float32) * col_scale[None, :]    # (C, 4H)
    whh_t = w_hh.T.astype(jnp.float32) * col_scale[None, :]    # (H, 4H)
    bias = ((b_ih + b_hh).astype(jnp.float32) * col_scale).reshape(1, H4)
    wfc_t = w_fc.T.astype(jnp.float32)                         # (H, P)

    out = pl.pallas_call(
        lstm_encoder_kernel,
        out_shape=jax.ShapeDtypeStruct((Bp, P), jnp.float32),
        in_specs=[pl.BlockSpec(memory_space=pltpu.MemorySpace.VMEM)] * 5,
        out_specs=pl.BlockSpec(memory_space=pltpu.MemorySpace.VMEM),
    )(x_tb, wih_t, whh_t, bias, wfc_t)
    return out[:B]


def eeg_encoder_reference(x, w_ih, w_hh, b_ih, b_hh, w_fc):
    """Pure-JAX reference matching torch.nn.LSTM + Linear(bias=False)."""
    B, T, C = x.shape
    H = w_hh.shape[1]

    def step(carry, x_t):
        h, c = carry
        gates = x_t @ w_ih.T + b_ih + h @ w_hh.T + b_hh
        i_g = jax.nn.sigmoid(gates[:, 0 * H:1 * H])
        f_g = jax.nn.sigmoid(gates[:, 1 * H:2 * H])
        g_g = jnp.tanh(gates[:, 2 * H:3 * H])
        o_g = jax.nn.sigmoid(gates[:, 3 * H:4 * H])
        c_new = f_g * c + i_g * g_g
        h_new = o_g * jnp.tanh(c_new)
        return (h_new, c_new), None

    h0 = jnp.zeros((B, H), jnp.float32)
    c0 = jnp.zeros((B, H), jnp.float32)
    (h_T, _), _ = jax.lax.scan(step, (h0, c0), jnp.swapaxes(x, 0, 1))
    return h_T @ w_fc.T


if __name__ == "__main__":
    # Small shapes consistent with EEG_Encoder.forward: x is (batch, seq, in_channels).
    B, T, C = 2, 8, 16          # batch, sequence length, in_channels
    H, P = 32, 32               # hidden_size (n_features), projection_dim

    key = jax.random.PRNGKey(0)
    k_x, k_ih, k_hh, k_bih, k_bhh, k_fc = jax.random.split(key, 6)

    x = jax.random.normal(k_x, (B, T, C), jnp.float32)
    scale = 1.0 / np.sqrt(H)
    w_ih = jax.random.uniform(k_ih, (4 * H, C), jnp.float32, -scale, scale)
    w_hh = jax.random.uniform(k_hh, (4 * H, H), jnp.float32, -scale, scale)
    b_ih = jax.random.uniform(k_bih, (4 * H,), jnp.float32, -scale, scale)
    b_hh = jax.random.uniform(k_bhh, (4 * H,), jnp.float32, -scale, scale)
    w_fc = jax.random.uniform(k_fc, (P, H), jnp.float32, -scale, scale)

    out = eeg_encoder_forward(x, w_ih, w_hh, b_ih, b_hh, w_fc)
    out = jax.block_until_ready(out)

    ref = eeg_encoder_reference(x, w_ih, w_hh, b_ih, b_hh, w_fc)
    np.testing.assert_allclose(np.asarray(out), np.asarray(ref),
                               rtol=1e-4, atol=2e-5)

    print("KERNEL_OK")
</pallas_src>

<mosaic_0001>
module attributes {stable_mosaic.version = 11 : i64} {
  func.func @lstm_encoder_kernel(%arg0: memref<64x16xf32, #tpu.memory_space<vmem>>, %arg1: memref<16x128xf32, #tpu.memory_space<vmem>>, %arg2: memref<32x128xf32, #tpu.memory_space<vmem>>, %arg3: memref<1x128xf32, #tpu.memory_space<vmem>>, %arg4: memref<32x32xf32, #tpu.memory_space<vmem>>, %arg5: memref<8x32xf32, #tpu.memory_space<vmem>>) attributes {dimension_semantics = [], scalar_prefetch = 0 : i64, scratch_operands = 0 : i64, tpu.core_type = #tpu.core_type<tc>} {
    %c0 = arith.constant 0 : index
    %c0_0 = arith.constant 0 : index
    %0 = vector.load %arg0[%c0, %c0_0] : memref<64x16xf32, #tpu.memory_space<vmem>>, vector<64x16xf32>
    %c0_1 = arith.constant 0 : index
    %c0_2 = arith.constant 0 : index
    %1 = vector.load %arg1[%c0_1, %c0_2] : memref<16x128xf32, #tpu.memory_space<vmem>>, vector<16x128xf32>
    %cst = arith.constant dense<0.000000e+00> : vector<64x128xf32>
    %2 = tpu.matmul %0, %1, %cst {dimension_numbers = #tpu.dot_dimension_numbers<[1], [0], [0], [1], [0, 0, 1, 1], [], []>} : vector<64x16xf32>, vector<16x128xf32>, vector<64x128xf32> -> vector<64x128xf32>
    %c0_3 = arith.constant 0 : index
    %c0_4 = arith.constant 0 : index
    %3 = vector.load %arg3[%c0_3, %c0_4] : memref<1x128xf32, #tpu.memory_space<vmem>>, vector<1x128xf32>
    %4 = vector.broadcast %3 : vector<1x128xf32> to vector<64x128xf32>
    %5 = arith.addf %2, %4 : vector<64x128xf32>
    %c0_5 = arith.constant 0 : index
    %c0_6 = arith.constant 0 : index
    %6 = vector.load %arg2[%c0_5, %c0_6] : memref<32x128xf32, #tpu.memory_space<vmem>>, vector<32x128xf32>
    %7 = tpu.iota {dimensions = array<i32: 1>} : vector<8x128xi32>
    %c64_i32 = arith.constant 64 : i32
    %8 = vector.broadcast %c64_i32 : i32 to vector<8x128xi32>
    %9 = arith.cmpi sge, %7, %8 : vector<8x128xi32>
    %c96_i32 = arith.constant 96 : i32
    %10 = vector.broadcast %c96_i32 : i32 to vector<8x128xi32>
    %11 = arith.cmpi slt, %7, %10 : vector<8x128xi32>
    %12 = arith.andi %9, %11 : vector<8x128xi1>
    %cst_7 = arith.constant 1.000000e+00 : f32
    %cst_8 = arith.constant 5.000000e-01 : f32
    %13 = vector.broadcast %cst_7 : f32 to vector<8x128xf32>
    %14 = vector.broadcast %cst_8 : f32 to vector<8x128xf32>
    %15 = arith.select %12, %13, %14 : vector<8x128xi1>, vector<8x128xf32>
    %cst_9 = arith.constant 0.000000e+00 : f32
    %cst_10 = arith.constant 5.000000e-01 : f32
    %16 = vector.broadcast %cst_9 : f32 to vector<8x128xf32>
    %17 = vector.broadcast %cst_10 : f32 to vector<8x128xf32>
    %18 = arith.select %12, %16, %17 : vector<8x128xi1>, vector<8x128xf32>
    %cst_11 = arith.constant 0.000000e+00 : f32
    %19 = vector.broadcast %cst_11 : f32 to vector<8x32xf32>
    %20 = vector.extract_strided_slice %5 {offsets = [0, 0], sizes = [8, 128], strides = [1, 1]} : vector<64x128xf32> to vector<8x128xf32>
    %21 = math.tanh %20 : vector<8x128xf32>
    %22 = arith.mulf %21, %15 : vector<8x128xf32>
    %23 = arith.addf %22, %18 : vector<8x128xf32>
    %24 = vector.extract_strided_slice %23 {offsets = [0, 0], sizes = [8, 32], strides = [1, 1]} : vector<8x128xf32> to vector<8x32xf32>
    %25 = vector.extract_strided_slice %23 {offsets = [0, 32], sizes = [8, 32], strides = [1, 1]} : vector<8x128xf32> to vector<8x32xf32>
    %26 = vector.extract_strided_slice %23 {offsets = [0, 64], sizes = [8, 32], strides = [1, 1]} : vector<8x128xf32> to vector<8x32xf32>
    %27 = vector.extract_strided_slice %23 {offsets = [0, 96], sizes = [8, 32], strides = [1, 1]} : vector<8x128xf32> to vector<8x32xf32>
    %28 = arith.mulf %25, %19 : vector<8x32xf32>
    %29 = arith.mulf %24, %26 : vector<8x32xf32>
    %30 = arith.addf %28, %29 : vector<8x32xf32>
    %31 = math.tanh %30 : vector<8x32xf32>
    %32 = arith.mulf %27, %31 : vector<8x32xf32>
    %33 = vector.extract_strided_slice %5 {offsets = [8, 0], sizes = [8, 128], strides = [1, 1]} : vector<64x128xf32> to vector<8x128xf32>
    %cst_12 = arith.constant dense<0.000000e+00> : vector<8x128xf32>
    %34 = tpu.matmul %32, %6, %cst_12 {dimension_numbers = #tpu.dot_dimension_numbers<[1], [0], [0], [1], [0, 0, 1, 1], [], []>} : vector<8x32xf32>, vector<32x128xf32>, vector<8x128xf32> -> vector<8x128xf32>
    %35 = arith.addf %33, %34 : vector<8x128xf32>
    %36 = math.tanh %35 : vector<8x128xf32>
    %37 = arith.mulf %36, %15 : vector<8x128xf32>
    %38 = arith.addf %37, %18 : vector<8x128xf32>
    %39 = vector.extract_strided_slice %38 {offsets = [0, 0], sizes = [8, 32], strides = [1, 1]} : vector<8x128xf32> to vector<8x32xf32>
    %40 = vector.extract_strided_slice %38 {offsets = [0, 32], sizes = [8, 32], strides = [1, 1]} : vector<8x128xf32> to vector<8x32xf32>
    %41 = vector.extract_strided_slice %38 {offsets = [0, 64], sizes = [8, 32], strides = [1, 1]} : vector<8x128xf32> to vector<8x32xf32>
    %42 = vector.extract_strided_slice %38 {offsets = [0, 96], sizes = [8, 32], strides = [1, 1]} : vector<8x128xf32> to vector<8x32xf32>
    %43 = arith.mulf %40, %30 : vector<8x32xf32>
    %44 = arith.mulf %39, %41 : vector<8x32xf32>
    %45 = arith.addf %43, %44 : vector<8x32xf32>
    %46 = math.tanh %45 : vector<8x32xf32>
    %47 = arith.mulf %42, %46 : vector<8x32xf32>
    %48 = vector.extract_strided_slice %5 {offsets = [16, 0], sizes = [8, 128], strides = [1, 1]} : vector<64x128xf32> to vector<8x128xf32>
    %cst_13 = arith.constant dense<0.000000e+00> : vector<8x128xf32>
    %49 = tpu.matmul %47, %6, %cst_13 {dimension_numbers = #tpu.dot_dimension_numbers<[1], [0], [0], [1], [0, 0, 1, 1], [], []>} : vector<8x32xf32>, vector<32x128xf32>, vector<8x128xf32> -> vector<8x128xf32>
    %50 = arith.addf %48, %49 : vector<8x128xf32>
    %51 = math.tanh %50 : vector<8x128xf32>
    %52 = arith.mulf %51, %15 : vector<8x128xf32>
    %53 = arith.addf %52, %18 : vector<8x128xf32>
    %54 = vector.extract_strided_slice %53 {offsets = [0, 0], sizes = [8, 32], strides = [1, 1]} : vector<8x128xf32> to vector<8x32xf32>
    %55 = vector.extract_strided_slice %53 {offsets = [0, 32], sizes = [8, 32], strides = [1, 1]} : vector<8x128xf32> to vector<8x32xf32>
    %56 = vector.extract_strided_slice %53 {offsets = [0, 64], sizes = [8, 32], strides = [1, 1]} : vector<8x128xf32> to vector<8x32xf32>
    %57 = vector.extract_strided_slice %53 {offsets = [0, 96], sizes = [8, 32], strides = [1, 1]} : vector<8x128xf32> to vector<8x32xf32>
    %58 = arith.mulf %55, %45 : vector<8x32xf32>
    %59 = arith.mulf %54, %56 : vector<8x32xf32>
    %60 = arith.addf %58, %59 : vector<8x32xf32>
    %61 = math.tanh %60 : vector<8x32xf32>
    %62 = arith.mulf %57, %61 : vector<8x32xf32>
    %63 = vector.extract_strided_slice %5 {offsets = [24, 0], sizes = [8, 128], strides = [1, 1]} : vector<64x128xf32> to vector<8x128xf32>
    %cst_14 = arith.constant dense<0.000000e+00> : vector<8x128xf32>
    %64 = tpu.matmul %62, %6, %cst_14 {dimension_numbers = #tpu.dot_dimension_numbers<[1], [0], [0], [1], [0, 0, 1, 1], [], []>} : vector<8x32xf32>, vector<32x128xf32>, vector<8x128xf32> -> vector<8x128xf32>
    %65 = arith.addf %63, %64 : vector<8x128xf32>
    %66 = math.tanh %65 : vector<8x128xf32>
    %67 = arith.mulf %66, %15 : vector<8x128xf32>
    %68 = arith.addf %67, %18 : vector<8x128xf32>
    %69 = vector.extract_strided_slice %68 {offsets = [0, 0], sizes = [8, 32], strides = [1, 1]} : vector<8x128xf32> to vector<8x32xf32>
    %70 = vector.extract_strided_slice %68 {offsets = [0, 32], sizes = [8, 32], strides = [1, 1]} : vector<8x128xf32> to vector<8x32xf32>
    %71 = vector.extract_strided_slice %68 {offsets = [0, 64], sizes = [8, 32], strides = [1, 1]} : vector<8x128xf32> to vector<8x32xf32>
    %72 = vector.extract_strided_slice %68 {offsets = [0, 96], sizes = [8, 32], strides = [1, 1]} : vector<8x128xf32> to vector<8x32xf32>
    %73 = arith.mulf %70, %60 : vector<8x32xf32>
    %74 = arith.mulf %69, %71 : vector<8x32xf32>
    %75 = arith.addf %73, %74 : vector<8x32xf32>
    %76 = math.tanh %75 : vector<8x32xf32>
    %77 = arith.mulf %72, %76 : vector<8x32xf32>
    %78 = vector.extract_strided_slice %5 {offsets = [32, 0], sizes = [8, 128], strides = [1, 1]} : vector<64x128xf32> to vector<8x128xf32>
    %cst_15 = arith.constant dense<0.000000e+00> : vector<8x128xf32>
    %79 = tpu.matmul %77, %6, %cst_15 {dimension_numbers = #tpu.dot_dimension_numbers<[1], [0], [0], [1], [0, 0, 1, 1], [], []>} : vector<8x32xf32>, vector<32x128xf32>, vector<8x128xf32> -> vector<8x128xf32>
    %80 = arith.addf %78, %79 : vector<8x128xf32>
    %81 = math.tanh %80 : vector<8x128xf32>
    %82 = arith.mulf %81, %15 : vector<8x128xf32>
    %83 = arith.addf %82, %18 : vector<8x128xf32>
    %84 = vector.extract_strided_slice %83 {offsets = [0, 0], sizes = [8, 32], strides = [1, 1]} : vector<8x128xf32> to vector<8x32xf32>
    %85 = vector.extract_strided_slice %83 {offsets = [0, 32], sizes = [8, 32], strides = [1, 1]} : vector<8x128xf32> to vector<8x32xf32>
    %86 = vector.extract_strided_slice %83 {offsets = [0, 64], sizes = [8, 32], strides = [1, 1]} : vector<8x128xf32> to vector<8x32xf32>
    %87 = vector.extract_strided_slice %83 {offsets = [0, 96], sizes = [8, 32], strides = [1, 1]} : vector<8x128xf32> to vector<8x32xf32>
    %88 = arith.mulf %85, %75 : vector<8x32xf32>
    %89 = arith.mulf %84, %86 : vector<8x32xf32>
    %90 = arith.addf %88, %89 : vector<8x32xf32>
    %91 = math.tanh %90 : vector<8x32xf32>
    %92 = arith.mulf %87, %91 : vector<8x32xf32>
    %93 = vector.extract_strided_slice %5 {offsets = [40, 0], sizes = [8, 128], strides = [1, 1]} : vector<64x128xf32> to vector<8x128xf32>
    %cst_16 = arith.constant dense<0.000000e+00> : vector<8x128xf32>
    %94 = tpu.matmul %92, %6, %cst_16 {dimension_numbers = #tpu.dot_dimension_numbers<[1], [0], [0], [1], [0, 0, 1, 1], [], []>} : vector<8x32xf32>, vector<32x128xf32>, vector<8x128xf32> -> vector<8x128xf32>
    %95 = arith.addf %93, %94 : vector<8x128xf32>
    %96 = math.tanh %95 : vector<8x128xf32>
    %97 = arith.mulf %96, %15 : vector<8x128xf32>
    %98 = arith.addf %97, %18 : vector<8x128xf32>
    %99 = vector.extract_strided_slice %98 {offsets = [0, 0], sizes = [8, 32], strides = [1, 1]} : vector<8x128xf32> to vector<8x32xf32>
    %100 = vector.extract_strided_slice %98 {offsets = [0, 32], sizes = [8, 32], strides = [1, 1]} : vector<8x128xf32> to vector<8x32xf32>
    %101 = vector.extract_strided_slice %98 {offsets = [0, 64], sizes = [8, 32], strides = [1, 1]} : vector<8x128xf32> to vector<8x32xf32>
    %102 = vector.extract_strided_slice %98 {offsets = [0, 96], sizes = [8, 32], strides = [1, 1]} : vector<8x128xf32> to vector<8x32xf32>
    %103 = arith.mulf %100, %90 : vector<8x32xf32>
    %104 = arith.mulf %99, %101 : vector<8x32xf32>
    %105 = arith.addf %103, %104 : vector<8x32xf32>
    %106 = math.tanh %105 : vector<8x32xf32>
    %107 = arith.mulf %102, %106 : vector<8x32xf32>
    %108 = vector.extract_strided_slice %5 {offsets = [48, 0], sizes = [8, 128], strides = [1, 1]} : vector<64x128xf32> to vector<8x128xf32>
    %cst_17 = arith.constant dense<0.000000e+00> : vector<8x128xf32>
    %109 = tpu.matmul %107, %6, %cst_17 {dimension_numbers = #tpu.dot_dimension_numbers<[1], [0], [0], [1], [0, 0, 1, 1], [], []>} : vector<8x32xf32>, vector<32x128xf32>, vector<8x128xf32> -> vector<8x128xf32>
    %110 = arith.addf %108, %109 : vector<8x128xf32>
    %111 = math.tanh %110 : vector<8x128xf32>
    %112 = arith.mulf %111, %15 : vector<8x128xf32>
    %113 = arith.addf %112, %18 : vector<8x128xf32>
    %114 = vector.extract_strided_slice %113 {offsets = [0, 0], sizes = [8, 32], strides = [1, 1]} : vector<8x128xf32> to vector<8x32xf32>
    %115 = vector.extract_strided_slice %113 {offsets = [0, 32], sizes = [8, 32], strides = [1, 1]} : vector<8x128xf32> to vector<8x32xf32>
    %116 = vector.extract_strided_slice %113 {offsets = [0, 64], sizes = [8, 32], strides = [1, 1]} : vector<8x128xf32> to vector<8x32xf32>
    %117 = vector.extract_strided_slice %113 {offsets = [0, 96], sizes = [8, 32], strides = [1, 1]} : vector<8x128xf32> to vector<8x32xf32>
    %118 = arith.mulf %115, %105 : vector<8x32xf32>
    %119 = arith.mulf %114, %116 : vector<8x32xf32>
    %120 = arith.addf %118, %119 : vector<8x32xf32>
    %121 = math.tanh %120 : vector<8x32xf32>
    %122 = arith.mulf %117, %121 : vector<8x32xf32>
    %123 = vector.extract_strided_slice %5 {offsets = [56, 0], sizes = [8, 128], strides = [1, 1]} : vector<64x128xf32> to vector<8x128xf32>
    %cst_18 = arith.constant dense<0.000000e+00> : vector<8x128xf32>
    %124 = tpu.matmul %122, %6, %cst_18 {dimension_numbers = #tpu.dot_dimension_numbers<[1], [0], [0], [1], [0, 0, 1, 1], [], []>} : vector<8x32xf32>, vector<32x128xf32>, vector<8x128xf32> -> vector<8x128xf32>
    %125 = arith.addf %123, %124 : vector<8x128xf32>
    %126 = math.tanh %125 : vector<8x128xf32>
    %127 = arith.mulf %126, %15 : vector<8x128xf32>
    %128 = arith.addf %127, %18 : vector<8x128xf32>
    %129 = vector.extract_strided_slice %128 {offsets = [0, 0], sizes = [8, 32], strides = [1, 1]} : vector<8x128xf32> to vector<8x32xf32>
    %130 = vector.extract_strided_slice %128 {offsets = [0, 32], sizes = [8, 32], strides = [1, 1]} : vector<8x128xf32> to vector<8x32xf32>
    %131 = vector.extract_strided_slice %128 {offsets = [0, 64], sizes = [8, 32], strides = [1, 1]} : vector<8x128xf32> to vector<8x32xf32>
    %132 = vector.extract_strided_slice %128 {offsets = [0, 96], sizes = [8, 32], strides = [1, 1]} : vector<8x128xf32> to vector<8x32xf32>
    %133 = arith.mulf %130, %120 : vector<8x32xf32>
    %134 = arith.mulf %129, %131 : vector<8x32xf32>
    %135 = arith.addf %133, %134 : vector<8x32xf32>
    %136 = math.tanh %135 : vector<8x32xf32>
    %137 = arith.mulf %132, %136 : vector<8x32xf32>
    %c0_19 = arith.constant 0 : index
    %c0_20 = arith.constant 0 : index
    %138 = vector.load %arg4[%c0_19, %c0_20] : memref<32x32xf32, #tpu.memory_space<vmem>>, vector<32x32xf32>
    %cst_21 = arith.constant dense<0.000000e+00> : vector<8x32xf32>
    %139 = tpu.matmul %137, %138, %cst_21 {dimension_numbers = #tpu.dot_dimension_numbers<[1], [0], [0], [1], [0, 0, 1, 1], [], []>} : vector<8x32xf32>, vector<32x32xf32>, vector<8x32xf32> -> vector<8x32xf32>
    %c0_22 = arith.constant 0 : index
    %c0_23 = arith.constant 0 : index
    %140 = vector.load %arg5[%c0_22, %c0_23] : memref<8x32xf32, #tpu.memory_space<vmem>>, vector<8x32xf32>
    tpu.vector_store %arg5[%c0_22, %c0_23], %139 {strides = array<i32>} : memref<8x32xf32, #tpu.memory_space<vmem>>, vector<8x32xf32>,
    return
  }
}

</mosaic_0001>

<llo_original>
// kernel: tpu_custom_call.1
$region0: #{tpu_custom_call.1}
  #allocation0 [shape = 'u32[]', space=smem, size = 0x4, offset = 0x4, fixed_abs, tag = 'smem constant byte address 0x4 - core index']
  #allocation1 [shape = 'u32[144,128]{1,0:T(1,128)}', space=vmem, size = 0x12000, scoped, tag = 'internal scratch']
  %s0 = inlined_call_operand.vmem [shape: f32[64,16], index: 0, kind: input, shape index: {}]
  %s1 = inlined_call_operand.vmem [shape: f32[16,128], index: 1, kind: input, shape index: {}]
  %s2 = inlined_call_operand.vmem [shape: f32[32,128], index: 2, kind: input, shape index: {}]
  %s3 = inlined_call_operand.vmem [shape: f32[1,128], index: 3, kind: input, shape index: {}]
  %s4 = inlined_call_operand.vmem [shape: f32[32,32], index: 4, kind: input, shape index: {}]
  %s5 = inlined_call_operand.hbm [shape: f32[8,32], index: 5, kind: output, shape index: {}]
  %s6 = sld [smem:[#allocation0]]
  $region30: #{tpu_custom_call.1} parent=0
    _
  %s8 = ssub.s32 1, %s6
  %s9 = scalar_select 0, %s8, %s6
  $region1: #{tpu_custom_call.1} parent=0
    #allocation2 [shape = 'u8[4096]{0}', space=vmem, size = 0x1000, scoped, tag = 'output window, operand 0, single buffered']
    #allocation3 [shape = 's32[1]{0}', space=sflag, size = 0x4, scoped, tag = 'scoped memory for tpu_custom_call.1']
    %10 = vsyncpa [#allocation3], 0
    // Predicated region
    $region2: #{tpu_custom_call.1} parent=1 // pred_check
      _
    $region3: #{tpu_custom_call.1} parent=1 // pred_check_branch
      %12 = sbr.rel (0) target = $region5
    $region4: #{tpu_custom_call.1} parent=1 // pred_region
      _
    $region5: #{tpu_custom_call.1} parent=1 // pred_fallthru
      _
    // Predicated region
    $region6: #{tpu_custom_call.1} parent=1 // pred_check
      _
    $region7: #{tpu_custom_call.1} parent=1 // pred_check_branch
      %14 = sbr.rel (0) target = $region9
    $region8: #{tpu_custom_call.1} parent=1 // pred_region
      _
    $region9: #{tpu_custom_call.1} parent=1 // pred_fallthru
      _
    // Predicated region
    $region10: #{tpu_custom_call.1} parent=1 // pred_check
      _
    $region11: #{tpu_custom_call.1} parent=1 // pred_check_branch
      %16 = sbr.rel (0) target = $region13
    $region12: #{tpu_custom_call.1} parent=1 // pred_region
      _
    $region13: #{tpu_custom_call.1} parent=1 // pred_fallthru
      _
    // Predicated region
    $region14: #{tpu_custom_call.1} parent=1 // pred_check
      _
    $region15: #{tpu_custom_call.1} parent=1 // pred_check_branch
      %18 = sbr.rel (0) target = $region17
    $region16: #{tpu_custom_call.1} parent=1 // pred_region
      _
    $region17: #{tpu_custom_call.1} parent=1 // pred_fallthru
      _
    // Predicated region
    $region18: #{tpu_custom_call.1} parent=1 // pred_check
      _
    $region19: #{tpu_custom_call.1} parent=1 // pred_check_branch
      %20 = sbr.rel (0) target = $region21
    $region20: #{tpu_custom_call.1} parent=1 // pred_region
      _
    $region21: #{tpu_custom_call.1} parent=1 // pred_fallthru
      _
    %v21 = vld [vmem:[%s0] sm:$0xff]
    %v22 = vld [vmem:[%s0 + $0x8] sm:$0xff]
    %v23 = vld [vmem:[%s0 + $0x10] sm:$0xff]
    %v24 = vld [vmem:[%s0 + $0x18] sm:$0xff]
    %v25 = vld [vmem:[%s0 + $0x20] sm:$0xff]
    %v26 = vld [vmem:[%s0 + $0x28] sm:$0xff]
    %v27 = vld [vmem:[%s0 + $0x30] sm:$0xff]
    %v28 = vld [vmem:[%s0 + $0x38] sm:$0xff]
    %v29 = vld [vmem:[%s1] sm:$0xff]
    %v30 = vld [vmem:[%s1 + $0x8] sm:$0xff]
    %v31 = vld [vmem:[%s3] sm:$0x1]
    %v33 = vlaneseq
    %v34 = vshrl.u32 %v33, 7
    %v35 = vsub.s32 0, %v34
    %v36 = vrot.slane %v31, %v35
    %vm38 = vcmask 130048
    %v40 = vsel %vm38, %v21, 0
    %v43 = vsel %vm38, %v22, 0
    %v46 = vsel %vm38, %v23, 0
    %v49 = vsel %vm38, %v24, 0
    %v52 = vsel %vm38, %v25, 0
    %v55 = vsel %vm38, %v26, 0
    %v58 = vsel %vm38, %v27, 0
    %v61 = vsel %vm38, %v28, 0
    %63 = vmatprep.subr.mxu0 0.0
    %64 = vmatpush1.msra.mxu0 0.0
    %65 = vmatprep.subr.mxu0 0.0
    %66 = vmatpush1.msra.mxu0 0.0
    %67 = vmatprep.subr.mxu0 0.0
    %68 = vmatpush1.msra.mxu0 0.0
    %69 = vmatprep.subr.mxu0 0.0
    %70 = vmatpush1.msra.mxu0 0.0
    %71 = vmatprep.subr.mxu0 0.0
    %72 = vmatpush1.msra.mxu0 0.0
    %73 = vmatprep.subr.mxu0 0.0
    %74 = vmatpush1.msra.mxu0 0.0
    %75 = vmatprep.subr.mxu0 0.0
    %76 = vmatpush1.msra.mxu0 0.0
    %77 = vmatprep.subr.mxu0 0.0
    %78 = vmatpush1.msra.mxu0 0.0
    %79 = vmatprep.subr.mxu0 0.0
    %80 = vmatpush1.msra.mxu0 0.0
    %81 = vmatprep.subr.mxu0 0.0
    %82 = vmatpush1.msra.mxu0 0.0
    %83 = vmatprep.subr.mxu0 0.0
    %84 = vmatpush1.msra.mxu0 0.0
    %85 = vmatprep.subr.mxu0 0.0
    %86 = vmatpush1.msra.mxu0 0.0
    %87 = vmatprep.subr.mxu0 0.0
    %88 = vmatpush1.msra.mxu0 0.0
    %89 = vmatprep.subr.mxu0 0.0
    %90 = vmatpush1.msra.mxu0 0.0
    %91 = vmatprep.subr.mxu0 0.0
    %92 = vmatpush1.msra.mxu0 %v30
    %93 = vmatprep.subr.mxu0 0.0
    %94 = vmatpush1.msra.mxu0 %v29
    %95 = vmatprep.subr.mxu0 0.0
    %96 = vmatpush2.msra.mxu0 0.0
    %97 = vmatprep.subr.mxu0 0.0
    %98 = vmatpush2.msra.mxu0 0.0
    %99 = vmatprep.subr.mxu0 0.0
    %100 = vmatpush2.msra.mxu0 0.0
    %101 = vmatprep.subr.mxu0 0.0
    %102 = vmatpush2.msra.mxu0 0.0
    %103 = vmatprep.subr.mxu0 0.0
    %104 = vmatpush2.msra.mxu0 0.0
    %105 = vmatprep.subr.mxu0 0.0
    %106 = vmatpush2.msra.mxu0 0.0
    %107 = vmatprep.subr.mxu0 0.0
    %108 = vmatpush2.msra.mxu0 0.0
    %109 = vmatprep.subr.mxu0 0.0
    %110 = vmatpush2.msra.mxu0 0.0
    %111 = vmatprep.subr.mxu0 0.0
    %112 = vmatpush2.msra.mxu0 0.0
    %113 = vmatprep.subr.mxu0 0.0
    %114 = vmatpush2.msra.mxu0 0.0
    %115 = vmatprep.subr.mxu0 0.0
    %116 = vmatpush2.msra.mxu0 0.0
    %117 = vmatprep.subr.mxu0 0.0
    %118 = vmatpush2.msra.mxu0 0.0
    %119 = vmatprep.subr.mxu0 0.0
    %120 = vmatpush2.msra.mxu0 0.0
    %121 = vmatprep.subr.mxu0 0.0
    %122 = vmatpush2.msra.mxu0 0.0
    %123 = vmatprep.subr.mxu0 0.0
    %124 = vmatpush2.msra.mxu0 0.0
    %125 = vmatprep.subr.mxu0 0.0
    %126 = vmatpush2.msra.mxu0 0.0
    %127 = vmatprep.mubr.f32.mxu0 0.0
    %128 = vmatmul.mubr.f32.gmra.mxu0 %v40
    %v129 = vpop.f32.mrf.mxu0
    %v130 = vadd.f32 %v36, %v129
    %v131 = vpop.f32.mrf.mxu0
    %132 = vmatprep.mubr.f32.mxu0 0.0
    %133 = vmatmul.mubr.f32.gmra.mxu0 %v43
    %v134 = vpop.f32.mrf.mxu0
    %v135 = vadd.f32 %v36, %v134
    %v136 = vpop.f32.mrf.mxu0
    %137 = vmatprep.mubr.f32.mxu0 0.0
    %138 = vmatmul.mubr.f32.gmra.mxu0 %v46
    %v139 = vpop.f32.mrf.mxu0
    %v140 = vadd.f32 %v36, %v139
    %v141 = vpop.f32.mrf.mxu0
    %142 = vmatprep.mubr.f32.mxu0 0.0
    %143 = vmatmul.mubr.f32.gmra.mxu0 %v49
    %v144 = vpop.f32.mrf.mxu0
    %v145 = vadd.f32 %v36, %v144
    %v146 = vpop.f32.mrf.mxu0
    %147 = vmatprep.mubr.f32.mxu0 0.0
    %148 = vmatmul.mubr.f32.gmra.mxu0 %v52
    %v149 = vpop.f32.mrf.mxu0
    %v150 = vadd.f32 %v36, %v149
    %v151 = vpop.f32.mrf.mxu0
    %152 = vmatprep.mubr.f32.mxu0 0.0
    %153 = vmatmul.mubr.f32.gmra.mxu0 %v55
    %v154 = vpop.f32.mrf.mxu0
    %v155 = vadd.f32 %v36, %v154
    %v156 = vpop.f32.mrf.mxu0
    %157 = vmatprep.mubr.f32.mxu0 0.0
    %158 = vmatmul.mubr.f32.gmra.mxu0 %v58
    %v159 = vpop.f32.mrf.mxu0
    %v160 = vadd.f32 %v36, %v159
    %v161 = vpop.f32.mrf.mxu0
    %162 = vmatprep.mubr.f32.mxu0 0.0
    %163 = vmatmul.mubr.f32.gmra.mxu0 %v61
    %v164 = vpop.f32.mrf.mxu0
    %v165 = vadd.f32 %v36, %v164
    %v166 = vpop.f32.mrf.mxu0
    %167 = vdwg.mxu0
    %v168 = vld [vmem:[%s2] sm:$0xff]
    %v169 = vld [vmem:[%s2 + $0x8] sm:$0xff]
    %v170 = vld [vmem:[%s2 + $0x10] sm:$0xff]
    %v171 = vld [vmem:[%s2 + $0x18] sm:$0xff]
    %v172 = vlaneseq
    %v173 = vand.u32 %v172, 127
    %vm174 = vcmp.ge.s32.totalorder %v173, 64
    %vm175 = vcmp.lt.s32.totalorder %v173, 96
    %vm176 = vmand %vm174, %vm175
    %v177 = vsel %vm176, 1.0, 0.5
    %v178 = vsel %vm176, 0.0, 0.5
    %v179 = vtanh.pop %v130
    %v180 = vmul.f32 %v179, %v177
    %v181 = vadd.f32 %v180, %v178
    %v182 = vmul.f32 %v181, 0.0
    %184 = vrot.lane.b32.xlu0 %v181, 64
    %v185 = vpop.permute.xlu0 %184
    %v187 = vmul.f32 %v181, %v185
    %189 = vrot.lane.b32.xlu0 %v187, 32
    %v190 = vpop.permute.xlu0 %189
    %v192 = vadd.f32 %v182, %v190
    %v193 = vtanh.pop %v192
    %195 = vrot.lane.b32.xlu0 %v193, 64
    %v196 = vpop.permute.xlu0 %195
    %v198 = vmul.f32 %v181, %v196
    %200 = vrot.lane.b32.xlu0 %v198, 32
    %v201 = vpop.permute.xlu0 %200
    %vm202 = vcmask 261120
    %v203 = vsel %vm202, %v201, 0
    %205 = vmatprep.subr.mxu0 0.0
    %206 = vmatpush1.msra.mxu0 0.0
    %207 = vmatprep.subr.mxu0 0.0
    %208 = vmatpush1.msra.mxu0 0.0
    %209 = vmatprep.subr.mxu0 0.0
    %210 = vmatpush1.msra.mxu0 0.0
    %211 = vmatprep.subr.mxu0 0.0
    %212 = vmatpush1.msra.mxu0 0.0
    %213 = vmatprep.subr.mxu0 0.0
    %214 = vmatpush1.msra.mxu0 0.0
    %215 = vmatprep.subr.mxu0 0.0
    %216 = vmatpush1.msra.mxu0 0.0
    %217 = vmatprep.subr.mxu0 0.0
    %218 = vmatpush1.msra.mxu0 0.0
    %219 = vmatprep.subr.mxu0 0.0
    %220 = vmatpush1.msra.mxu0 0.0
    %221 = vmatprep.subr.mxu0 0.0
    %222 = vmatpush1.msra.mxu0 0.0
    %223 = vmatprep.subr.mxu0 0.0
    %224 = vmatpush1.msra.mxu0 0.0
    %225 = vmatprep.subr.mxu0 0.0
    %226 = vmatpush1.msra.mxu0 0.0
    %227 = vmatprep.subr.mxu0 0.0
    %228 = vmatpush1.msra.mxu0 0.0
    %229 = vmatprep.subr.mxu0 0.0
    %230 = vmatpush1.msra.mxu0 %v171
    %231 = vmatprep.subr.mxu0 0.0
    %232 = vmatpush1.msra.mxu0 %v170
    %233 = vmatprep.subr.mxu0 0.0
    %234 = vmatpush1.msra.mxu0 %v169
    %235 = vmatprep.subr.mxu0 0.0
    %236 = vmatpush1.msra.mxu0 %v168
    %237 = vmatprep.subr.mxu0 0.0
    %238 = vmatpush2.msra.mxu0 0.0
    %239 = vmatprep.subr.mxu0 0.0
    %240 = vmatpush2.msra.mxu0 0.0
    %241 = vmatprep.subr.mxu0 0.0
    %242 = vmatpush2.msra.mxu0 0.0
    %243 = vmatprep.subr.mxu0 0.0
    %244 = vmatpush2.msra.mxu0 0.0
    %245 = vmatprep.subr.mxu0 0.0
    %246 = vmatpush2.msra.mxu0 0.0
    %247 = vmatprep.subr.mxu0 0.0
    %248 = vmatpush2.msra.mxu0 0.0
    %249 = vmatprep.subr.mxu0 0.0
    %250 = vmatpush2.msra.mxu0 0.0
    %251 = vmatprep.subr.mxu0 0.0
    %252 = vmatpush2.msra.mxu0 0.0
    %253 = vmatprep.subr.mxu0 0.0
    %254 = vmatpush2.msra.mxu0 0.0
    %255 = vmatprep.subr.mxu0 0.0
    %256 = vmatpush2.msra.mxu0 0.0
    %257 = vmatprep.subr.mxu0 0.0
    %258 = vmatpush2.msra.mxu0 0.0
    %259 = vmatprep.subr.mxu0 0.0
    %260 = vmatpush2.msra.mxu0 0.0
    %261 = vmatprep.subr.mxu0 0.0
    %262 = vmatpush2.msra.mxu0 0.0
    %263 = vmatprep.subr.mxu0 0.0
    %264 = vmatpush2.msra.mxu0 0.0
    %265 = vmatprep.subr.mxu0 0.0
    %266 = vmatpush2.msra.mxu0 0.0
    %267 = vmatprep.subr.mxu0 0.0
    %268 = vmatpush2.msra.mxu0 0.0
    %269 = vmatprep.mubr.f32.mxu0 0.0
    %270 = vmatmul.mubr.f32.gmra.mxu0 %v203
    %v271 = vpop.f32.mrf.mxu0
    %v272 = vadd.f32 0.0, %v271
    %v273 = vpop.f32.mrf.mxu0
    %274 = vdwg.mxu0
    %v275 = vadd.f32 %v135, %v272
    %v276 = vtanh.pop %v275
    %v277 = vmul.f32 %v276, %v177
    %v278 = vadd.f32 %v277, %v178
    %v279 = vmul.f32 %v278, %v192
    %281 = vrot.lane.b32.xlu0 %v278, 64
    %v282 = vpop.permute.xlu0 %281
    %v284 = vmul.f32 %v278, %v282
    %286 = vrot.lane.b32.xlu0 %v284, 32
    %v287 = vpop.permute.xlu0 %286
    %v289 = vadd.f32 %v279, %v287
    %v290 = vtanh.pop %v289
    %292 = vrot.lane.b32.xlu0 %v290, 64
    %v293 = vpop.permute.xlu0 %292
    %v295 = vmul.f32 %v278, %v293
    %297 = vrot.lane.b32.xlu0 %v295, 32
    %v298 = vpop.permute.xlu0 %297
    %v299 = vsel %vm202, %v298, 0
    %301 = vmatprep.subr.mxu0 0.0
    %302 = vmatpush1.msra.mxu0 0.0
    %303 = vmatprep.subr.mxu0 0.0
    %304 = vmatpush1.msra.mxu0 0.0
    %305 = vmatprep.subr.mxu0 0.0
    %306 = vmatpush1.msra.mxu0 0.0
    %307 = vmatprep.subr.mxu0 0.0
    %308 = vmatpush1.msra.mxu0 0.0
    %309 = vmatprep.subr.mxu0 0.0
    %310 = vmatpush1.msra.mxu0 0.0
    %311 = vmatprep.subr.mxu0 0.0
    %312 = vmatpush1.msra.mxu0 0.0
    %313 = vmatprep.subr.mxu0 0.0
    %314 = vmatpush1.msra.mxu0 0.0
    %315 = vmatprep.subr.mxu0 0.0
    %316 = vmatpush1.msra.mxu0 0.0
    %317 = vmatprep.subr.mxu0 0.0
    %318 = vmatpush1.msra.mxu0 0.0
    %319 = vmatprep.subr.mxu0 0.0
    %320 = vmatpush1.msra.mxu0 0.0
    %321 = vmatprep.subr.mxu0 0.0
    %322 = vmatpush1.msra.mxu0 0.0
    %323 = vmatprep.subr.mxu0 0.0
    %324 = vmatpush1.msra.mxu0 0.0
    %325 = vmatprep.subr.mxu0 0.0
    %326 = vmatpush1.msra.mxu0 %v171
    %327 = vmatprep.subr.mxu0 0.0
    %328 = vmatpush1.msra.mxu0 %v170
    %329 = vmatprep.subr.mxu0 0.0
    %330 = vmatpush1.msra.mxu0 %v169
    %331 = vmatprep.subr.mxu0 0.0
    %332 = vmatpush1.msra.mxu0 %v168
    %333 = vmatprep.subr.mxu0 0.0
    %334 = vmatpush2.msra.mxu0 0.0
    %335 = vmatprep.subr.mxu0 0.0
    %336 = vmatpush2.msra.mxu0 0.0
    %337 = vmatprep.subr.mxu0 0.0
    %338 = vmatpush2.msra.mxu0 0.0
    %339 = vmatprep.subr.mxu0 0.0
    %340 = vmatpush2.msra.mxu0 0.0
    %341 = vmatprep.subr.mxu0 0.0
    %342 = vmatpush2.msra.mxu0 0.0
    %343 = vmatprep.subr.mxu0 0.0
    %344 = vmatpush2.msra.mxu0 0.0
    %345 = vmatprep.subr.mxu0 0.0
    %346 = vmatpush2.msra.mxu0 0.0
    %347 = vmatprep.subr.mxu0 0.0
    %348 = vmatpush2.msra.mxu0 0.0
    %349 = vmatprep.subr.mxu0 0.0
    %350 = vmatpush2.msra.mxu0 0.0
    %351 = vmatprep.subr.mxu0 0.0
    %352 = vmatpush2.msra.mxu0 0.0
    %353 = vmatprep.subr.mxu0 0.0
    %354 = vmatpush2.msra.mxu0 0.0
    %355 = vmatprep.subr.mxu0 0.0
    %356 = vmatpush2.msra.mxu0 0.0
    %357 = vmatprep.subr.mxu0 0.0
    %358 = vmatpush2.msra.mxu0 0.0
    %359 = vmatprep.subr.mxu0 0.0
    %360 = vmatpush2.msra.mxu0 0.0
    %361 = vmatprep.subr.mxu0 0.0
    %362 = vmatpush2.msra.mxu0 0.0
    %363 = vmatprep.subr.mxu0 0.0
    %364 = vmatpush2.msra.mxu0 0.0
    %365 = vmatprep.mubr.f32.mxu0 0.0
    %366 = vmatmul.mubr.f32.gmra.mxu0 %v299
    %v367 = vpop.f32.mrf.mxu0
    %v368 = vadd.f32 0.0, %v367
    %v369 = vpop.f32.mrf.mxu0
    %370 = vdwg.mxu0
    %v371 = vadd.f32 %v140, %v368
    %v372 = vtanh.pop %v371
    %v373 = vmul.f32 %v372, %v177
    %v374 = vadd.f32 %v373, %v178
    %v375 = vmul.f32 %v374, %v289
    %377 = vrot.lane.b32.xlu0 %v374, 64
    %v378 = vpop.permute.xlu0 %377
    %v380 = vmul.f32 %v374, %v378
    %382 = vrot.lane.b32.xlu0 %v380, 32
    %v383 = vpop.permute.xlu0 %382
    %v385 = vadd.f32 %v375, %v383
    %v386 = vtanh.pop %v385
    %388 = vrot.lane.b32.xlu0 %v386, 64
    %v389 = vpop.permute.xlu0 %388
    %v391 = vmul.f32 %v374, %v389
    %393 = vrot.lane.b32.xlu0 %v391, 32
    %v394 = vpop.permute.xlu0 %393
    %v395 = vsel %vm202, %v394, 0
    %397 = vmatprep.subr.mxu0 0.0
    %398 = vmatpush1.msra.mxu0 0.0
    %399 = vmatprep.subr.mxu0 0.0
    %400 = vmatpush1.msra.mxu0 0.0
    %401 = vmatprep.subr.mxu0 0.0
    %402 = vmatpush1.msra.mxu0 0.0
    %403 = vmatprep.subr.mxu0 0.0
    %404 = vmatpush1.msra.mxu0 0.0
    %405 = vmatprep.subr.mxu0 0.0
    %406 = vmatpush1.msra.mxu0 0.0
    %407 = vmatprep.subr.mxu0 0.0
    %408 = vmatpush1.msra.mxu0 0.0
    %409 = vmatprep.subr.mxu0 0.0
    %410 = vmatpush1.msra.mxu0 0.0
    %411 = vmatprep.subr.mxu0 0.0
    %412 = vmatpush1.msra.mxu0 0.0
    %413 = vmatprep.subr.mxu0 0.0
    %414 = vmatpush1.msra.mxu0 0.0
    %415 = vmatprep.subr.mxu0 0.0
    %416 = vmatpush1.msra.mxu0 0.0
    %417 = vmatprep.subr.mxu0 0.0
    %418 = vmatpush1.msra.mxu0 0.0
    %419 = vmatprep.subr.mxu0 0.0
    %420 = vmatpush1.msra.mxu0 0.0
    %421 = vmatprep.subr.mxu0 0.0
    %422 = vmatpush1.msra.mxu0 %v171
    %423 = vmatprep.subr.mxu0 0.0
    %424 = vmatpush1.msra.mxu0 %v170
    %425 = vmatprep.subr.mxu0 0.0
    %426 = vmatpush1.msra.mxu0 %v169
    %427 = vmatprep.subr.mxu0 0.0
    %428 = vmatpush1.msra.mxu0 %v168
    %429 = vmatprep.subr.mxu0 0.0
    %430 = vmatpush2.msra.mxu0 0.0
    %431 = vmatprep.subr.mxu0 0.0
    %432 = vmatpush2.msra.mxu0 0.0
    %433 = vmatprep.subr.mxu0 0.0
    %434 = vmatpush2.msra.mxu0 0.0
    %435 = vmatprep.subr.mxu0 0.0
    %436 = vmatpush2.msra.mxu0 0.0
    %437 = vmatprep.subr.mxu0 0.0
    %438 = vmatpush2.msra.mxu0 0.0
    %439 = vmatprep.subr.mxu0 0.0
    %440 = vmatpush2.msra.mxu0 0.0
    %441 = vmatprep.subr.mxu0 0.0
    %442 = vmatpush2.msra.mxu0 0.0
    %443 = vmatprep.subr.mxu0 0.0
    %444 = vmatpush2.msra.mxu0 0.0
    %445 = vmatprep.subr.mxu0 0.0
    %446 = vmatpush2.msra.mxu0 0.0
    %447 = vmatprep.subr.mxu0 0.0
    %448 = vmatpush2.msra.mxu0 0.0
    %449 = vmatprep.subr.mxu0 0.0
    %450 = vmatpush2.msra.mxu0 0.0
    %451 = vmatprep.subr.mxu0 0.0
    %452 = vmatpush2.msra.mxu0 0.0
    %453 = vmatprep.subr.mxu0 0.0
    %454 = vmatpush2.msra.mxu0 0.0
    %455 = vmatprep.subr.mxu0 0.0
    %456 = vmatpush2.msra.mxu0 0.0
    %457 = vmatprep.subr.mxu0 0.0
    %458 = vmatpush2.msra.mxu0 0.0
    %459 = vmatprep.subr.mxu0 0.0
    %460 = vmatpush2.msra.mxu0 0.0
    %461 = vmatprep.mubr.f32.mxu0 0.0
    %462 = vmatmul.mubr.f32.gmra.mxu0 %v395
    %v463 = vpop.f32.mrf.mxu0
    %v464 = vadd.f32 0.0, %v463
    %v465 = vpop.f32.mrf.mxu0
    %466 = vdwg.mxu0
    %v467 = vadd.f32 %v145, %v464
    %v468 = vtanh.pop %v467
    %v469 = vmul.f32 %v468, %v177
    %v470 = vadd.f32 %v469, %v178
    %v471 = vmul.f32 %v470, %v385
    %473 = vrot.lane.b32.xlu0 %v470, 64
    %v474 = vpop.permute.xlu0 %473
    %v476 = vmul.f32 %v470, %v474
    %478 = vrot.lane.b32.xlu0 %v476, 32
    %v479 = vpop.permute.xlu0 %478
    %v481 = vadd.f32 %v471, %v479
    %v482 = vtanh.pop %v481
    %484 = vrot.lane.b32.xlu0 %v482, 64
    %v485 = vpop.permute.xlu0 %484
    %v487 = vmul.f32 %v470, %v485
    %489 = vrot.lane.b32.xlu0 %v487, 32
    %v490 = vpop.permute.xlu0 %489
    %v491 = vsel %vm202, %v490, 0
    %493 = vmatprep.subr.mxu0 0.0
    %494 = vmatpush1.msra.mxu0 0.0
    %495 = vmatprep.subr.mxu0 0.0
    %496 = vmatpush1.msra.mxu0 0.0
    %497 = vmatprep.subr.mxu0 0.0
    %498 = vmatpush1.msra.mxu0 0.0
    %499 = vmatprep.subr.mxu0 0.0
    %500 = vmatpush1.msra.mxu0 0.0
    %501 = vmatprep.subr.mxu0 0.0
    %502 = vmatpush1.msra.mxu0 0.0
    %503 = vmatprep.subr.mxu0 0.0
    %504 = vmatpush1.msra.mxu0 0.0
    %505 = vmatprep.subr.mxu0 0.0
    %506 = vmatpush1.msra.mxu0 0.0
    %507 = vmatprep.subr.mxu0 0.0
    %508 = vmatpush1.msra.mxu0 0.0
    %509 = vmatprep.subr.mxu0 0.0
    %510 = vmatpush1.msra.mxu0 0.0
    %511 = vmatprep.subr.mxu0 0.0
    %512 = vmatpush1.msra.mxu0 0.0
    %513 = vmatprep.subr.mxu0 0.0
    %514 = vmatpush1.msra.mxu0 0.0
    %515 = vmatprep.subr.mxu0 0.0
    %516 = vmatpush1.msra.mxu0 0.0
    %517 = vmatprep.subr.mxu0 0.0
    %518 = vmatpush1.msra.mxu0 %v171
    %519 = vmatprep.subr.mxu0 0.0
    %520 = vmatpush1.msra.mxu0 %v170
    %521 = vmatprep.subr.mxu0 0.0
    %522 = vmatpush1.msra.mxu0 %v169
    %523 = vmatprep.subr.mxu0 0.0
    %524 = vmatpush1.msra.mxu0 %v168
    %525 = vmatprep.subr.mxu0 0.0
    %526 = vmatpush2.msra.mxu0 0.0
    %527 = vmatprep.subr.mxu0 0.0
    %528 = vmatpush2.msra.mxu0 0.0
    %529 = vmatprep.subr.mxu0 0.0
    %530 = vmatpush2.msra.mxu0 0.0
    %531 = vmatprep.subr.mxu0 0.0
    %532 = vmatpush2.msra.mxu0 0.0
    %533 = vmatprep.subr.mxu0 0.0
    %534 = vmatpush2.msra.mxu0 0.0
    %535 = vmatprep.subr.mxu0 0.0
    %536 = vmatpush2.msra.mxu0 0.0
    %537 = vmatprep.subr.mxu0 0.0
    %538 = vmatpush2.msra.mxu0 0.0
    %539 = vmatprep.subr.mxu0 0.0
    %540 = vmatpush2.msra.mxu0 0.0
    %541 = vmatprep.subr.mxu0 0.0
    %542 = vmatpush2.msra.mxu0 0.0
    %543 = vmatprep.subr.mxu0 0.0
    %544 = vmatpush2.msra.mxu0 0.0
    %545 = vmatprep.subr.mxu0 0.0
    %546 = vmatpush2.msra.mxu0 0.0
    %547 = vmatprep.subr.mxu0 0.0
    %548 = vmatpush2.msra.mxu0 0.0
    %549 = vmatprep.subr.mxu0 0.0
    %550 = vmatpush2.msra.mxu0 0.0
    %551 = vmatprep.subr.mxu0 0.0
    %552 = vmatpush2.msra.mxu0 0.0
    %553 = vmatprep.subr.mxu0 0.0
    %554 = vmatpush2.msra.mxu0 0.0
    %555 = vmatprep.subr.mxu0 0.0
    %556 = vmatpush2.msra.mxu0 0.0
    %557 = vmatprep.mubr.f32.mxu0 0.0
    %558 = vmatmul.mubr.f32.gmra.mxu0 %v491
    %v559 = vpop.f32.mrf.mxu0
    %v560 = vadd.f32 0.0, %v559
    %v561 = vpop.f32.mrf.mxu0
    %562 = vdwg.mxu0
    %v563 = vadd.f32 %v150, %v560
    %v564 = vtanh.pop %v563
    %v565 = vmul.f32 %v564, %v177
    %v566 = vadd.f32 %v565, %v178
    %v567 = vmul.f32 %v566, %v481
    %569 = vrot.lane.b32.xlu0 %v566, 64
    %v570 = vpop.permute.xlu0 %569
    %v572 = vmul.f32 %v566, %v570
    %574 = vrot.lane.b32.xlu0 %v572, 32
    %v575 = vpop.permute.xlu0 %574
    %v577 = vadd.f32 %v567, %v575
    %v578 = vtanh.pop %v577
    %580 = vrot.lane.b32.xlu0 %v578, 64
    %v581 = vpop.permute.xlu0 %580
    %v583 = vmul.f32 %v566, %v581
    %585 = vrot.lane.b32.xlu0 %v583, 32
    %v586 = vpop.permute.xlu0 %585
    %v587 = vsel %vm202, %v586, 0
    %589 = vmatprep.subr.mxu0 0.0
    %590 = vmatpush1.msra.mxu0 0.0
    %591 = vmatprep.subr.mxu0 0.0
    %592 = vmatpush1.msra.mxu0 0.0
    %593 = vmatprep.subr.mxu0 0.0
    %594 = vmatpush1.msra.mxu0 0.0
    %595 = vmatprep.subr.mxu0 0.0
    %596 = vmatpush1.msra.mxu0 0.0
    %597 = vmatprep.subr.mxu0 0.0
    %598 = vmatpush1.msra.mxu0 0.0
    %599 = vmatprep.subr.mxu0 0.0
    %600 = vmatpush1.msra.mxu0 0.0
    %601 = vmatprep.subr.mxu0 0.0
    %602 = vmatpush1.msra.mxu0 0.0
    %603 = vmatprep.subr.mxu0 0.0
    %604 = vmatpush1.msra.mxu0 0.0
    %605 = vmatprep.subr.mxu0 0.0
    %606 = vmatpush1.msra.mxu0 0.0
    %607 = vmatprep.subr.mxu0 0.0
    %608 = vmatpush1.msra.mxu0 0.0
    %609 = vmatprep.subr.mxu0 0.0
    %610 = vmatpush1.msra.mxu0 0.0
    %611 = vmatprep.subr.mxu0 0.0
    %612 = vmatpush1.msra.mxu0 0.0
    %613 = vmatprep.subr.mxu0 0.0
    %614 = vmatpush1.msra.mxu0 %v171
    %615 = vmatprep.subr.mxu0 0.0
    %616 = vmatpush1.msra.mxu0 %v170
    %617 = vmatprep.subr.mxu0 0.0
    %618 = vmatpush1.msra.mxu0 %v169
    %619 = vmatprep.subr.mxu0 0.0
    %620 = vmatpush1.msra.mxu0 %v168
    %621 = vmatprep.subr.mxu0 0.0
    %622 = vmatpush2.msra.mxu0 0.0
    %623 = vmatprep.subr.mxu0 0.0
    %624 = vmatpush2.msra.mxu0 0.0
    %625 = vmatprep.subr.mxu0 0.0
    %626 = vmatpush2.msra.mxu0 0.0
    %627 = vmatprep.subr.mxu0 0.0
    %628 = vmatpush2.msra.mxu0 0.0
    %629 = vmatprep.subr.mxu0 0.0
    %630 = vmatpush2.msra.mxu0 0.0
    %631 = vmatprep.subr.mxu0 0.0
    %632 = vmatpush2.msra.mxu0 0.0
    %633 = vmatprep.subr.mxu0 0.0
    %634 = vmatpush2.msra.mxu0 0.0
    %635 = vmatprep.subr.mxu0 0.0
    %636 = vmatpush2.msra.mxu0 0.0
    %637 = vmatprep.subr.mxu0 0.0
    %638 = vmatpush2.msra.mxu0 0.0
    %639 = vmatprep.subr.mxu0 0.0
    %640 = vmatpush2.msra.mxu0 0.0
    %641 = vmatprep.subr.mxu0 0.0
    %642 = vmatpush2.msra.mxu0 0.0
    %643 = vmatprep.subr.mxu0 0.0
    %644 = vmatpush2.msra.mxu0 0.0
    %645 = vmatprep.subr.mxu0 0.0
    %646 = vmatpush2.msra.mxu0 0.0
    %647 = vmatprep.subr.mxu0 0.0
    %648 = vmatpush2.msra.mxu0 0.0
    %649 = vmatprep.subr.mxu0 0.0
    %650 = vmatpush2.msra.mxu0 0.0
    %651 = vmatprep.subr.mxu0 0.0
    %652 = vmatpush2.msra.mxu0 0.0
    %653 = vmatprep.mubr.f32.mxu0 0.0
    %654 = vmatmul.mubr.f32.gmra.mxu0 %v587
    %v655 = vpop.f32.mrf.mxu0
    %v656 = vadd.f32 0.0, %v655
    %v657 = vpop.f32.mrf.mxu0
    %658 = vdwg.mxu0
    %v659 = vadd.f32 %v155, %v656
    %v660 = vtanh.pop %v659
    %v661 = vmul.f32 %v660, %v177
    %v662 = vadd.f32 %v661, %v178
    %v663 = vmul.f32 %v662, %v577
    %665 = vrot.lane.b32.xlu0 %v662, 64
    %v666 = vpop.permute.xlu0 %665
    %v668 = vmul.f32 %v662, %v666
    %670 = vrot.lane.b32.xlu0 %v668, 32
    %v671 = vpop.permute.xlu0 %670
    %v673 = vadd.f32 %v663, %v671
    %v674 = vtanh.pop %v673
    %676 = vrot.lane.b32.xlu0 %v674, 64
    %v677 = vpop.permute.xlu0 %676
    %v679 = vmul.f32 %v662, %v677
    %681 = vrot.lane.b32.xlu0 %v679, 32
    %v682 = vpop.permute.xlu0 %681
    %v683 = vsel %vm202, %v682, 0
    %685 = vmatprep.subr.mxu0 0.0
    %686 = vmatpush1.msra.mxu0 0.0
    %687 = vmatprep.subr.mxu0 0.0
    %688 = vmatpush1.msra.mxu0 0.0
    %689 = vmatprep.subr.mxu0 0.0
    %690 = vmatpush1.msra.mxu0 0.0
    %691 = vmatprep.subr.mxu0 0.0
    %692 = vmatpush1.msra.mxu0 0.0
    %693 = vmatprep.subr.mxu0 0.0
    %694 = vmatpush1.msra.mxu0 0.0
    %695 = vmatprep.subr.mxu0 0.0
    %696 = vmatpush1.msra.mxu0 0.0
    %697 = vmatprep.subr.mxu0 0.0
    %698 = vmatpush1.msra.mxu0 0.0
    %699 = vmatprep.subr.mxu0 0.0
    %700 = vmatpush1.msra.mxu0 0.0
    %701 = vmatprep.subr.mxu0 0.0
    %702 = vmatpush1.msra.mxu0 0.0
    %703 = vmatprep.subr.mxu0 0.0
    %704 = vmatpush1.msra.mxu0 0.0
    %705 = vmatprep.subr.mxu0 0.0
    %706 = vmatpush1.msra.mxu0 0.0
    %707 = vmatprep.subr.mxu0 0.0
    %708 = vmatpush1.msra.mxu0 0.0
    %709 = vmatprep.subr.mxu0 0.0
    %710 = vmatpush1.msra.mxu0 %v171
    %711 = vmatprep.subr.mxu0 0.0
    %712 = vmatpush1.msra.mxu0 %v170
    %713 = vmatprep.subr.mxu0 0.0
    %714 = vmatpush1.msra.mxu0 %v169
    %715 = vmatprep.subr.mxu0 0.0
    %716 = vmatpush1.msra.mxu0 %v168
    %717 = vmatprep.subr.mxu0 0.0
    %718 = vmatpush2.msra.mxu0 0.0
    %719 = vmatprep.subr.mxu0 0.0
    %720 = vmatpush2.msra.mxu0 0.0
    %721 = vmatprep.subr.mxu0 0.0
    %722 = vmatpush2.msra.mxu0 0.0
    %723 = vmatprep.subr.mxu0 0.0
    %724 = vmatpush2.msra.mxu0 0.0
    %725 = vmatprep.subr.mxu0 0.0
    %726 = vmatpush2.msra.mxu0 0.0
    %727 = vmatprep.subr.mxu0 0.0
    %728 = vmatpush2.msra.mxu0 0.0
    %729 = vmatprep.subr.mxu0 0.0
    %730 = vmatpush2.msra.mxu0 0.0
    %731 = vmatprep.subr.mxu0 0.0
    %732 = vmatpush2.msra.mxu0 0.0
    %733 = vmatprep.subr.mxu0 0.0
    %734 = vmatpush2.msra.mxu0 0.0
    %735 = vmatprep.subr.mxu0 0.0
    %736 = vmatpush2.msra.mxu0 0.0
    %737 = vmatprep.subr.mxu0 0.0
    %738 = vmatpush2.msra.mxu0 0.0
    %739 = vmatprep.subr.mxu0 0.0
    %740 = vmatpush2.msra.mxu0 0.0
    %741 = vmatprep.subr.mxu0 0.0
    %742 = vmatpush2.msra.mxu0 0.0
    %743 = vmatprep.subr.mxu0 0.0
    %744 = vmatpush2.msra.mxu0 0.0
    %745 = vmatprep.subr.mxu0 0.0
    %746 = vmatpush2.msra.mxu0 0.0
    %747 = vmatprep.subr.mxu0 0.0
    %748 = vmatpush2.msra.mxu0 0.0
    %749 = vmatprep.mubr.f32.mxu0 0.0
    %750 = vmatmul.mubr.f32.gmra.mxu0 %v683
    %v751 = vpop.f32.mrf.mxu0
    %v752 = vadd.f32 0.0, %v751
    %v753 = vpop.f32.mrf.mxu0
    %754 = vdwg.mxu0
    %v755 = vadd.f32 %v160, %v752
    %v756 = vtanh.pop %v755
    %v757 = vmul.f32 %v756, %v177
    %v758 = vadd.f32 %v757, %v178
    %v759 = vmul.f32 %v758, %v673
    %761 = vrot.lane.b32.xlu0 %v758, 64
    %v762 = vpop.permute.xlu0 %761
    %v764 = vmul.f32 %v758, %v762
    %766 = vrot.lane.b32.xlu0 %v764, 32
    %v767 = vpop.permute.xlu0 %766
    %v769 = vadd.f32 %v759, %v767
    %v770 = vtanh.pop %v769
    %772 = vrot.lane.b32.xlu0 %v770, 64
    %v773 = vpop.permute.xlu0 %772
    %v775 = vmul.f32 %v758, %v773
    %777 = vrot.lane.b32.xlu0 %v775, 32
    %v778 = vpop.permute.xlu0 %777
    %v779 = vsel %vm202, %v778, 0
    %781 = vmatprep.subr.mxu0 0.0
    %782 = vmatpush1.msra.mxu0 0.0
    %783 = vmatprep.subr.mxu0 0.0
    %784 = vmatpush1.msra.mxu0 0.0
    %785 = vmatprep.subr.mxu0 0.0
    %786 = vmatpush1.msra.mxu0 0.0
    %787 = vmatprep.subr.mxu0 0.0
    %788 = vmatpush1.msra.mxu0 0.0
    %789 = vmatprep.subr.mxu0 0.0
    %790 = vmatpush1.msra.mxu0 0.0
    %791 = vmatprep.subr.mxu0 0.0
    %792 = vmatpush1.msra.mxu0 0.0
    %793 = vmatprep.subr.mxu0 0.0
    %794 = vmatpush1.msra.mxu0 0.0
    %795 = vmatprep.subr.mxu0 0.0
    %796 = vmatpush1.msra.mxu0 0.0
    %797 = vmatprep.subr.mxu0 0.0
    %798 = vmatpush1.msra.mxu0 0.0
    %799 = vmatprep.subr.mxu0 0.0
    %800 = vmatpush1.msra.mxu0 0.0
    %801 = vmatprep.subr.mxu0 0.0
    %802 = vmatpush1.msra.mxu0 0.0
    %803 = vmatprep.subr.mxu0 0.0
    %804 = vmatpush1.msra.mxu0 0.0
    %805 = vmatprep.subr.mxu0 0.0
    %806 = vmatpush1.msra.mxu0 %v171
    %807 = vmatprep.subr.mxu0 0.0
    %808 = vmatpush1.msra.mxu0 %v170
    %809 = vmatprep.subr.mxu0 0.0
    %810 = vmatpush1.msra.mxu0 %v169
    %811 = vmatprep.subr.mxu0 0.0
    %812 = vmatpush1.msra.mxu0 %v168
    %813 = vmatprep.subr.mxu0 0.0
    %814 = vmatpush2.msra.mxu0 0.0
    %815 = vmatprep.subr.mxu0 0.0
    %816 = vmatpush2.msra.mxu0 0.0
    %817 = vmatprep.subr.mxu0 0.0
    %818 = vmatpush2.msra.mxu0 0.0
    %819 = vmatprep.subr.mxu0 0.0
    %820 = vmatpush2.msra.mxu0 0.0
    %821 = vmatprep.subr.mxu0 0.0
    %822 = vmatpush2.msra.mxu0 0.0
    %823 = vmatprep.subr.mxu0 0.0
    %824 = vmatpush2.msra.mxu0 0.0
    %825 = vmatprep.subr.mxu0 0.0
    %826 = vmatpush2.msra.mxu0 0.0
    %827 = vmatprep.subr.mxu0 0.0
    %828 = vmatpush2.msra.mxu0 0.0
    %829 = vmatprep.subr.mxu0 0.0
    %830 = vmatpush2.msra.mxu0 0.0
    %831 = vmatprep.subr.mxu0 0.0
    %832 = vmatpush2.msra.mxu0 0.0
    %833 = vmatprep.subr.mxu0 0.0
    %834 = vmatpush2.msra.mxu0 0.0
    %835 = vmatprep.subr.mxu0 0.0
    %836 = vmatpush2.msra.mxu0 0.0
    %837 = vmatprep.subr.mxu0 0.0
    %838 = vmatpush2.msra.mxu0 0.0
    %839 = vmatprep.subr.mxu0 0.0
    %840 = vmatpush2.msra.mxu0 0.0
    %841 = vmatprep.subr.mxu0 0.0
    %842 = vmatpush2.msra.mxu0 0.0
    %843 = vmatprep.subr.mxu0 0.0
    %844 = vmatpush2.msra.mxu0 0.0
    %845 = vmatprep.mubr.f32.mxu0 0.0
    %846 = vmatmul.mubr.f32.gmra.mxu0 %v779
    %v847 = vpop.f32.mrf.mxu0
    %v848 = vadd.f32 0.0, %v847
    %v849 = vpop.f32.mrf.mxu0
    %850 = vdwg.mxu0
    %v851 = vadd.f32 %v165, %v848
    %v852 = vtanh.pop %v851
    %v853 = vmul.f32 %v852, %v177
    %v854 = vadd.f32 %v853, %v178
    %v855 = vmul.f32 %v854, %v769
    %857 = vrot.lane.b32.xlu0 %v854, 64
    %v858 = vpop.permute.xlu0 %857
    %v860 = vmul.f32 %v854, %v858
    %862 = vrot.lane.b32.xlu0 %v860, 32
    %v863 = vpop.permute.xlu0 %862
    %v865 = vadd.f32 %v855, %v863
    %v866 = vtanh.pop %v865
    %868 = vrot.lane.b32.xlu0 %v866, 64
    %v869 = vpop.permute.xlu0 %868
    %v871 = vmul.f32 %v854, %v869
    %v872 = vld [vmem:[%s4] sm:$0xff]
    %v873 = vld [vmem:[%s4 + $0x8] sm:$0xff]
    %v874 = vld [vmem:[%s4 + $0x10] sm:$0xff]
    %v875 = vld [vmem:[%s4 + $0x18] sm:$0xff]
    %877 = vrot.lane.b32.xlu0 %v871, 32
    %v878 = vpop.permute.xlu0 %877
    %v879 = vsel %vm202, %v878, 0
    %881 = vmatprep.subr.mxu0 0.0
    %882 = vmatpush1.msra.mxu0 0.0
    %883 = vmatprep.subr.mxu0 0.0
    %884 = vmatpush1.msra.mxu0 0.0
    %885 = vmatprep.subr.mxu0 0.0
    %886 = vmatpush1.msra.mxu0 0.0
    %887 = vmatprep.subr.mxu0 0.0
    %888 = vmatpush1.msra.mxu0 0.0
    %889 = vmatprep.subr.mxu0 0.0
    %890 = vmatpush1.msra.mxu0 0.0
    %891 = vmatprep.subr.mxu0 0.0
    %892 = vmatpush1.msra.mxu0 0.0
    %893 = vmatprep.subr.mxu0 0.0
    %894 = vmatpush1.msra.mxu0 0.0
    %895 = vmatprep.subr.mxu0 0.0
    %896 = vmatpush1.msra.mxu0 0.0
    %897 = vmatprep.subr.mxu0 0.0
    %898 = vmatpush1.msra.mxu0 0.0
    %899 = vmatprep.subr.mxu0 0.0
    %900 = vmatpush1.msra.mxu0 0.0
    %901 = vmatprep.subr.mxu0 0.0
    %902 = vmatpush1.msra.mxu0 0.0
    %903 = vmatprep.subr.mxu0 0.0
    %904 = vmatpush1.msra.mxu0 0.0
    %905 = vmatprep.subr.mxu0 0.0
    %906 = vmatpush1.msra.mxu0 %v875
    %907 = vmatprep.subr.mxu0 0.0
    %908 = vmatpush1.msra.mxu0 %v874
    %909 = vmatprep.subr.mxu0 0.0
    %910 = vmatpush1.msra.mxu0 %v873
    %911 = vmatprep.subr.mxu0 0.0
    %912 = vmatpush1.msra.mxu0 %v872
    %913 = vmatprep.subr.mxu0 0.0
    %914 = vmatpush2.msra.mxu0 0.0
    %915 = vmatprep.subr.mxu0 0.0
    %916 = vmatpush2.msra.mxu0 0.0
    %917 = vmatprep.subr.mxu0 0.0
    %918 = vmatpush2.msra.mxu0 0.0
    %919 = vmatprep.subr.mxu0 0.0
    %920 = vmatpush2.msra.mxu0 0.0
    %921 = vmatprep.subr.mxu0 0.0
    %922 = vmatpush2.msra.mxu0 0.0
    %923 = vmatprep.subr.mxu0 0.0
    %924 = vmatpush2.msra.mxu0 0.0
    %925 = vmatprep.subr.mxu0 0.0
    %926 = vmatpush2.msra.mxu0 0.0
    %927 = vmatprep.subr.mxu0 0.0
    %928 = vmatpush2.msra.mxu0 0.0
    %929 = vmatprep.subr.mxu0 0.0
    %930 = vmatpush2.msra.mxu0 0.0
    %931 = vmatprep.subr.mxu0 0.0
    %932 = vmatpush2.msra.mxu0 0.0
    %933 = vmatprep.subr.mxu0 0.0
    %934 = vmatpush2.msra.mxu0 0.0
    %935 = vmatprep.subr.mxu0 0.0
    %936 = vmatpush2.msra.mxu0 0.0
    %937 = vmatprep.subr.mxu0 0.0
    %938 = vmatpush2.msra.mxu0 0.0
    %939 = vmatprep.subr.mxu0 0.0
    %940 = vmatpush2.msra.mxu0 0.0
    %941 = vmatprep.subr.mxu0 0.0
    %942 = vmatpush2.msra.mxu0 0.0
    %943 = vmatprep.subr.mxu0 0.0
    %944 = vmatpush2.msra.mxu0 0.0
    %945 = vmatprep.mubr.f32.mxu0 0.0
    %946 = vmatmul.mubr.f32.gmra.mxu0 %v879
    %v947 = vpop.f32.mrf.mxu0
    %v948 = vadd.f32 0.0, %v947
    %v949 = vpop.f32.mrf.mxu0
    %950 = vdwg.mxu0
    %951 = vst.msk [vmem:[#allocation2] sm:$0xff] %vm202, %v948
    // Predicated region
    $region22: #{tpu_custom_call.1} parent=1 // pred_check
      _
    $region23: #{tpu_custom_call.1} parent=1 // pred_check_branch
      %953 = sbr.rel (0) target = $region25
    $region24: #{tpu_custom_call.1} parent=1 // pred_region
      %s955 = ssub.s32 128, 128
      %956 = vsyncadd [#allocation3], %s955
      %s958 = sshll.u32 [#allocation2], 4
      %s959 = int_to_ptr.vmem [resolvable:$true] %s958
      %961 = dma.vmem_to_hbm [thread:$0]  %s959, 128, %s5, [#allocation3]
    $region25: #{tpu_custom_call.1} parent=1 // pred_fallthru
      _
    // Predicated region
    $region26: #{tpu_custom_call.1} parent=1 // pred_check
      _
    $region27: #{tpu_custom_call.1} parent=1 // pred_check_branch
      %963 = sbr.rel (0) target = $region29
    $region28: #{tpu_custom_call.1} parent=1 // pred_region
      %964 = dma.done [#allocation3], 128
    $region29: #{tpu_custom_call.1} parent=1 // pred_fallthru
      _
    %965 = vsyncpa [#allocation3], 1

</llo_original>
